<compile_context>
chip_gen: v7x
topology: tpu7x:2x2x1
jax: 0.10.0
libtpu: 0.0.40
codegen_flags: <defaults>
</compile_context>

<pallas_src>
import functools

import jax
import jax.numpy as jnp
from jax.experimental import pallas as pl
from jax.experimental.pallas import tpu as pltpu


def _round_up(x: int, m: int) -> int:
    return (x + m - 1) // m * m


def _choose_tm(M: int, block_m: int) -> int:
    """Row-tile size: multiple of 16 (bf16 sublane packing), capped at block_m,
    and split into >=2 grid steps when everything would fit one tile so the
    parallel grid axis can shard across both v7x TensorCores."""
    m16 = _round_up(max(M, 1), 16)
    tm = min(_round_up(block_m, 16), m16)
    if tm == m16 and m16 >= 32:          # single grid step -> split in two
        tm = _round_up((m16 + 1) // 2, 16)
    return tm


def _vmem_limit_bytes(tm, H, slab, n_inputs, x_itm, w_itm, o_itm):
    # Honest estimate: Pallas double-buffers every input block, including the
    # constant-index weight/bias blocks, and double-buffers the output.
    est = (2 * n_inputs * tm * H * x_itm        # activation tiles
           + 2 * tm * slab * o_itm              # packed output tile
           + 2 * n_inputs * H * slab * w_itm    # "resident" weights (x2 buffers)
           + 2 * slab * 4)                      # packed f32 bias
    try:                                        # generation-aware VMEM capacity
        cap = getattr(pltpu.get_tpu_info(), "vmem_capacity_bytes", 64 << 20)
    except Exception:
        cap = 64 << 20                          # conservative (v7x per-TC)
    return int(min(max(2 * est + (4 << 20), 32 << 20), cap * 4 // 5))


# ----------------------------- kernels ------------------------------------- #

def _qkv_packed_kernel(xq_ref, xk_ref, xv_ref,
                       wq_ref, wk_ref, wv_ref, b_ref, o_ref):
    # f32 activations cast to bf16 on the VPU; the three weights occupy
    # disjoint columns of the 128-aligned slab, so summing the f32 accumulators
    # lands [q | k | v | pad] in place -> one unmasked lane-dense store.
    cdt = wq_ref.dtype
    acc = jnp.dot(xq_ref[...].astype(cdt), wq_ref[...],
                  preferred_element_type=jnp.float32)
    acc = acc + jnp.dot(xk_ref[...].astype(cdt), wk_ref[...],
                        preferred_element_type=jnp.float32)
    acc = acc + jnp.dot(xv_ref[...].astype(cdt), wv_ref[...],
                        preferred_element_type=jnp.float32)
    o_ref[...] = (acc + b_ref[...]).astype(o_ref.dtype)


def _qkv_fused_kernel(x_ref, w_ref, b_ref, o_ref):
    # Self-attention fast path: single activation read, one dot against the
    # fused (H, slab) weight.
    x = x_ref[...].astype(w_ref.dtype)
    acc = jnp.dot(x, w_ref[...], preferred_element_type=jnp.float32)
    o_ref[...] = (acc + b_ref[...]).astype(o_ref.dtype)


# ----------------------- pallas_call wrappers ------------------------------ #

def _qkv_projection_packed(xq, xk, xv, wq_p, wk_p, wv_p, b_packed, *, block_m,
                           out_dtype=jnp.bfloat16):
    """xq/xk/xv: (M, H) f32; w*_p: (H, slab) bf16; b_packed: (1, slab) f32.
    Returns packed (Mp, slab) bf16 slab [q | k | v | pad]."""
    M, H = xq.shape
    slab = wq_p.shape[1]
    tm = _choose_tm(M, block_m)
    Mp = _round_up(M, tm)
    if Mp != M:
        pad = ((0, Mp - M), (0, 0))
        xq, xk, xv = (jnp.pad(x, pad) for x in (xq, xk, xv))

    x_spec = pl.BlockSpec((tm, H), lambda i: (i, 0))
    w_spec = pl.BlockSpec((H, slab), lambda i: (0, 0))   # VMEM-resident
    b_spec = pl.BlockSpec((1, slab), lambda i: (0, 0))
    o_spec = pl.BlockSpec((tm, slab), lambda i: (i, 0))

    vmem_limit = _vmem_limit_bytes(
        tm, H, slab, 3,
        jnp.dtype(xq.dtype).itemsize, jnp.dtype(wq_p.dtype).itemsize,
        jnp.dtype(out_dtype).itemsize)

    return pl.pallas_call(
        _qkv_packed_kernel,
        out_shape=jax.ShapeDtypeStruct((Mp, slab), out_dtype),
        grid=(Mp // tm,),
        in_specs=[x_spec, x_spec, x_spec, w_spec, w_spec, w_spec, b_spec],
        out_specs=o_spec,
        compiler_params=pltpu.CompilerParams(
            dimension_semantics=("parallel",),      # megacore split over M
            vmem_limit_bytes=vmem_limit),
    )(xq, xk, xv, wq_p, wk_p, wv_p, b_packed)


def _qkv_projection_self(x, w_fused, b_packed, *, block_m,
                         out_dtype=jnp.bfloat16):
    """x: (M, H) f32; w_fused: (H, slab) bf16. Packed (Mp, slab) bf16 output."""
    M, H = x.shape
    slab = w_fused.shape[1]
    tm = _choose_tm(M, block_m)
    Mp = _round_up(M, tm)
    if Mp != M:
        x = jnp.pad(x, ((0, Mp - M), (0, 0)))

    x_spec = pl.BlockSpec((tm, H), lambda i: (i, 0))
    w_spec = pl.BlockSpec((H, slab), lambda i: (0, 0))
    b_spec = pl.BlockSpec((1, slab), lambda i: (0, 0))
    o_spec = pl.BlockSpec((tm, slab), lambda i: (i, 0))

    vmem_limit = _vmem_limit_bytes(
        tm, H, slab, 1,
        jnp.dtype(x.dtype).itemsize, jnp.dtype(w_fused.dtype).itemsize,
        jnp.dtype(out_dtype).itemsize)

    return pl.pallas_call(
        _qkv_fused_kernel,
        out_shape=jax.ShapeDtypeStruct((Mp, slab), out_dtype),
        grid=(Mp // tm,),
        in_specs=[x_spec, w_spec, b_spec],
        out_specs=o_spec,
        compiler_params=pltpu.CompilerParams(
            dimension_semantics=("parallel",),
            vmem_limit_bytes=vmem_limit),
    )(x, w_fused, b_packed)


# --------------------------- jitted forward -------------------------------- #

def _split_heads(packed, M, N, L, E, heads, col0):
    hd = E // heads
    y = packed[:M, col0:col0 + E]                     # bf16 glue; cast last
    return y.reshape(N, L, heads, hd).transpose(0, 2, 1, 3).astype(jnp.float32)


@functools.partial(jax.jit, static_argnames=("encoding_size", "heads", "block_m"))
def _mha_forward(q, k, v, wq_p, wk_p, wv_p, b_packed, *,
                 encoding_size, heads, block_m):
    N, L, Hs = q.shape
    M = N * L
    packed = _qkv_projection_packed(
        q.reshape(M, Hs), k.reshape(M, Hs), v.reshape(M, Hs),
        wq_p, wk_p, wv_p, b_packed, block_m=block_m)
    E = encoding_size
    return (_split_heads(packed, M, N, L, E, heads, 0),
            _split_heads(packed, M, N, L, E, heads, E),
            _split_heads(packed, M, N, L, E, heads, 2 * E))


@functools.partial(jax.jit, static_argnames=("encoding_size", "heads", "block_m"))
def _mha_forward_self(x, w_fused, b_packed, *, encoding_size, heads, block_m):
    N, L, Hs = x.shape
    M = N * L
    packed = _qkv_projection_self(x.reshape(M, Hs), w_fused, b_packed,
                                  block_m=block_m)
    E = encoding_size
    return (_split_heads(packed, M, N, L, E, heads, 0),
            _split_heads(packed, M, N, L, E, heads, E),
            _split_heads(packed, M, N, L, E, heads, 2 * E))


# ------------------------------- module ------------------------------------ #

class MultiHeadAttentionPallas:
    def __init__(self, hidden_size, max_length, encoding_size, heads, key,
                 compute_dtype=jnp.bfloat16, block_m=1024):
        if encoding_size % heads != 0:
            raise ValueError("encoding_size(E) must be divisible by # of heads")
        self.hidden_size = hidden_size
        self.max_length = max_length
        self.encoding_size = encoding_size
        self.heads = heads
        self.block_m = block_m

        ks = jax.random.split(key, 6)
        scale = 0.02
        # PyTorch nn.Linear weight is (out, in); we store pre-transposed (in, out).
        self.wq = scale * jax.random.normal(ks[0], (hidden_size, encoding_size), jnp.float32)
        self.wk = scale * jax.random.normal(ks[1], (hidden_size, encoding_size), jnp.float32)
        self.wv = scale * jax.random.normal(ks[2], (hidden_size, encoding_size), jnp.float32)
        self.bq = scale * jax.random.normal(ks[3], (1, encoding_size), jnp.float32)
        self.bk = scale * jax.random.normal(ks[4], (1, encoding_size), jnp.float32)
        self.bv = scale * jax.random.normal(ks[5], (1, encoding_size), jnp.float32)

        # Pack compute-dtype weights / f32 bias ONCE (no per-call cast pass).
        E = encoding_size
        slab = _round_up(3 * E, 128)
        self.slab = slab

        def place_w(w, j):
            buf = jnp.zeros((hidden_size, slab), compute_dtype)
            return buf.at[:, j * E:(j + 1) * E].set(w.astype(compute_dtype))

        self.wq_p = place_w(self.wq, 0)
        self.wk_p = place_w(self.wk, 1)
        self.wv_p = place_w(self.wv, 2)
        self.w_fused = self.wq_p + self.wk_p + self.wv_p   # disjoint columns

        b = jnp.zeros((1, slab), jnp.float32)
        b = b.at[:, 0:E].set(self.bq)
        b = b.at[:, E:2 * E].set(self.bk)
        b = b.at[:, 2 * E:3 * E].set(self.bv)
        self.b_packed = b

    def forward(self, q, k, v):
        N, L, Hs = q.shape
        assert L == self.max_length and Hs == self.hidden_size
        if q is k and k is v:       # self-attention fast path: 1 read, 1 dot
            return _mha_forward_self(q, self.w_fused, self.b_packed,
                                     encoding_size=self.encoding_size,
                                     heads=self.heads, block_m=self.block_m)
        return _mha_forward(q, k, v, self.wq_p, self.wk_p, self.wv_p,
                            self.b_packed,
                            encoding_size=self.encoding_size,
                            heads=self.heads, block_m=self.block_m)


if __name__ == "__main__":
    hidden_size = 32
    max_length = 8
    encoding_size = 32
    heads = 4
    N = 2

    key = jax.random.PRNGKey(0)
    kq, kk, kv, kp = jax.random.split(key, 4)
    q = jax.random.normal(kq, (N, max_length, hidden_size), jnp.float32)
    k = jax.random.normal(kk, (N, max_length, hidden_size), jnp.float32)
    v = jax.random.normal(kv, (N, max_length, hidden_size), jnp.float32)

    mha = MultiHeadAttentionPallas(hidden_size, max_length, encoding_size, heads, kp)
    oq, ok, ov = mha.forward(q, k, v)
    jax.block_until_ready((oq, ok, ov))

    # Pure-JAX f32 reference (bf16 compute -> loosened tolerance).
    def ref_proj(x, w, b):
        y = x.reshape(N * max_length, hidden_size) @ w + b
        return y.reshape(N, max_length, heads,
                         encoding_size // heads).transpose(0, 2, 1, 3)

    rq = ref_proj(q, mha.wq, mha.bq)
    rk = ref_proj(k, mha.wk, mha.bk)
    rv = ref_proj(v, mha.wv, mha.bv)
    assert oq.shape == (N, heads, max_length, encoding_size // heads)
    assert oq.dtype == jnp.float32
    assert jnp.allclose(oq, rq, atol=2e-2, rtol=2e-2)
    assert jnp.allclose(ok, rk, atol=2e-2, rtol=2e-2)
    assert jnp.allclose(ov, rv, atol=2e-2, rtol=2e-2)

    # Self-attention fast path (q is k is v): fused weight, single input read.
    sq, sk, sv = mha.forward(q, q, q)
    jax.block_until_ready((sq, sk, sv))
    assert jnp.allclose(sq, ref_proj(q, mha.wq, mha.bq), atol=2e-2, rtol=2e-2)
    assert jnp.allclose(sk, ref_proj(q, mha.wk, mha.bk), atol=2e-2, rtol=2e-2)
    assert jnp.allclose(sv, ref_proj(q, mha.wv, mha.bv), atol=2e-2, rtol=2e-2)

    print("KERNEL_OK")
</pallas_src>

<mosaic_0001>
module attributes {stable_mosaic.version = 11 : i64} {
  func.func @_qkv_packed_kernel(%arg0: i32, %arg1: memref<16x32xf32, #tpu.memory_space<vmem>>, %arg2: memref<16x32xf32, #tpu.memory_space<vmem>>, %arg3: memref<16x32xf32, #tpu.memory_space<vmem>>, %arg4: memref<32x128xbf16, #tpu.memory_space<vmem>>, %arg5: memref<32x128xbf16, #tpu.memory_space<vmem>>, %arg6: memref<32x128xbf16, #tpu.memory_space<vmem>>, %arg7: memref<1x128xf32, #tpu.memory_space<vmem>>, %arg8: memref<16x128xbf16, #tpu.memory_space<vmem>>) attributes {dimension_semantics = [#tpu.dimension_semantics<parallel>], iteration_bounds = array<i64: 1>, scalar_prefetch = 0 : i64, scratch_operands = 0 : i64, tpu.core_type = #tpu.core_type<tc>, window_params = [{transform_indices = @transform_0, window_bounds = array<i64: 16, 32>}, {transform_indices = @transform_1, window_bounds = array<i64: 16, 32>}, {transform_indices = @transform_2, window_bounds = array<i64: 16, 32>}, {pipeline_mode = #tpu.pipeline_mode<synchronous>, transform_indices = @transform_3, window_bounds = array<i64: 32, 128>}, {pipeline_mode = #tpu.pipeline_mode<synchronous>, transform_indices = @transform_4, window_bounds = array<i64: 32, 128>}, {pipeline_mode = #tpu.pipeline_mode<synchronous>, transform_indices = @transform_5, window_bounds = array<i64: 32, 128>}, {pipeline_mode = #tpu.pipeline_mode<synchronous>, transform_indices = @transform_6, window_bounds = array<i64: 1, 128>}, {transform_indices = @transform_7, window_bounds = array<i64: 16, 128>}]} {
    %c0 = arith.constant 0 : index
    %c0_0 = arith.constant 0 : index
    %0 = vector.load %arg1[%c0, %c0_0] : memref<16x32xf32, #tpu.memory_space<vmem>>, vector<16x32xf32>
    %1 = arith.truncf %0 : vector<16x32xf32> to vector<16x32xbf16>
    %c0_1 = arith.constant 0 : index
    %c0_2 = arith.constant 0 : index
    %2 = vector.load %arg4[%c0_1, %c0_2] : memref<32x128xbf16, #tpu.memory_space<vmem>>, vector<32x128xbf16>
    %cst = arith.constant dense<0.000000e+00> : vector<16x128xf32>
    %3 = tpu.matmul %1, %2, %cst {dimension_numbers = #tpu.dot_dimension_numbers<[1], [0], [0], [1], [0, 0, 1, 1], [], []>} : vector<16x32xbf16>, vector<32x128xbf16>, vector<16x128xf32> -> vector<16x128xf32>
    %c0_3 = arith.constant 0 : index
    %c0_4 = arith.constant 0 : index
    %4 = vector.load %arg2[%c0_3, %c0_4] : memref<16x32xf32, #tpu.memory_space<vmem>>, vector<16x32xf32>
    %5 = arith.truncf %4 : vector<16x32xf32> to vector<16x32xbf16>
    %c0_5 = arith.constant 0 : index
    %c0_6 = arith.constant 0 : index
    %6 = vector.load %arg5[%c0_5, %c0_6] : memref<32x128xbf16, #tpu.memory_space<vmem>>, vector<32x128xbf16>
    %cst_7 = arith.constant dense<0.000000e+00> : vector<16x128xf32>
    %7 = tpu.matmul %5, %6, %cst_7 {dimension_numbers = #tpu.dot_dimension_numbers<[1], [0], [0], [1], [0, 0, 1, 1], [], []>} : vector<16x32xbf16>, vector<32x128xbf16>, vector<16x128xf32> -> vector<16x128xf32>
    %8 = arith.addf %3, %7 : vector<16x128xf32>
    %c0_8 = arith.constant 0 : index
    %c0_9 = arith.constant 0 : index
    %9 = vector.load %arg3[%c0_8, %c0_9] : memref<16x32xf32, #tpu.memory_space<vmem>>, vector<16x32xf32>
    %10 = arith.truncf %9 : vector<16x32xf32> to vector<16x32xbf16>
    %c0_10 = arith.constant 0 : index
    %c0_11 = arith.constant 0 : index
    %11 = vector.load %arg6[%c0_10, %c0_11] : memref<32x128xbf16, #tpu.memory_space<vmem>>, vector<32x128xbf16>
    %cst_12 = arith.constant dense<0.000000e+00> : vector<16x128xf32>
    %12 = tpu.matmul %10, %11, %cst_12 {dimension_numbers = #tpu.dot_dimension_numbers<[1], [0], [0], [1], [0, 0, 1, 1], [], []>} : vector<16x32xbf16>, vector<32x128xbf16>, vector<16x128xf32> -> vector<16x128xf32>
    %13 = arith.addf %8, %12 : vector<16x128xf32>
    %c0_13 = arith.constant 0 : index
    %c0_14 = arith.constant 0 : index
    %14 = vector.load %arg7[%c0_13, %c0_14] : memref<1x128xf32, #tpu.memory_space<vmem>>, vector<1x128xf32>
    %15 = vector.broadcast %14 : vector<1x128xf32> to vector<16x128xf32>
    %16 = arith.addf %13, %15 : vector<16x128xf32>
    %17 = arith.truncf %16 : vector<16x128xf32> to vector<16x128xbf16>
    %c0_15 = arith.constant 0 : index
    %c0_16 = arith.constant 0 : index
    %18 = vector.load %arg8[%c0_15, %c0_16] : memref<16x128xbf16, #tpu.memory_space<vmem>>, vector<16x128xbf16>
    tpu.vector_store %arg8[%c0_15, %c0_16], %17 {strides = array<i32>} : memref<16x128xbf16, #tpu.memory_space<vmem>>, vector<16x128xbf16>,
    return
  }
  func.func @transform_0(%arg0: i32) -> (i32, i32) {
    %c0_i32 = arith.constant 0 : i32
    %c0_i32_0 = arith.constant 0 : i32
    return %arg0, %c0_i32 : i32, i32
  }
  func.func @transform_1(%arg0: i32) -> (i32, i32) {
    %c0_i32 = arith.constant 0 : i32
    %c0_i32_0 = arith.constant 0 : i32
    return %arg0, %c0_i32 : i32, i32
  }
  func.func @transform_2(%arg0: i32) -> (i32, i32) {
    %c0_i32 = arith.constant 0 : i32
    %c0_i32_0 = arith.constant 0 : i32
    return %arg0, %c0_i32 : i32, i32
  }
  func.func @transform_3(%arg0: i32) -> (i32, i32) {
    %c0_i32 = arith.constant 0 : i32
    %c0_i32_0 = arith.constant 0 : i32
    %c0_i32_1 = arith.constant 0 : i32
    return %c0_i32, %c0_i32_0 : i32, i32
  }
  func.func @transform_4(%arg0: i32) -> (i32, i32) {
    %c0_i32 = arith.constant 0 : i32
    %c0_i32_0 = arith.constant 0 : i32
    %c0_i32_1 = arith.constant 0 : i32
    return %c0_i32, %c0_i32_0 : i32, i32
  }
  func.func @transform_5(%arg0: i32) -> (i32, i32) {
    %c0_i32 = arith.constant 0 : i32
    %c0_i32_0 = arith.constant 0 : i32
    %c0_i32_1 = arith.constant 0 : i32
    return %c0_i32, %c0_i32_0 : i32, i32
  }
  func.func @transform_6(%arg0: i32) -> (i32, i32) {
    %c0_i32 = arith.constant 0 : i32
    %c0_i32_0 = arith.constant 0 : i32
    %c0_i32_1 = arith.constant 0 : i32
    return %c0_i32, %c0_i32_0 : i32, i32
  }
  func.func @transform_7(%arg0: i32) -> (i32, i32) {
    %c0_i32 = arith.constant 0 : i32
    %c0_i32_0 = arith.constant 0 : i32
    return %arg0, %c0_i32 : i32, i32
  }
}

</mosaic_0001>

<llo_original>
// kernel: _mha_forward.1
$region0: #{_mha_forward.1}
  #allocation0 [shape = 'u32[]', space=smem, size = 0x4, offset = 0x4, fixed_abs, tag = 'smem constant byte address 0x4 - core index']
  #allocation1 [shape = 'u32[144,128]{1,0:T(1,128)}', space=vmem, size = 0x12000, scoped, tag = 'internal scratch']
  %s0 = inlined_call_operand.hbm [shape: f32[16,32], index: 0, kind: input, shape index: {}]
  %s1 = inlined_call_operand.hbm [shape: f32[16,32], index: 1, kind: input, shape index: {}]
  %s2 = inlined_call_operand.vmem [shape: f32[16,32], index: 2, kind: input, shape index: {}]
  %s3 = inlined_call_operand.hbm [shape: bf16[32,128], index: 3, kind: input, shape index: {}]
  %s4 = inlined_call_operand.hbm [shape: bf16[32,128], index: 4, kind: input, shape index: {}]
  %s5 = inlined_call_operand.hbm [shape: bf16[32,128], index: 5, kind: input, shape index: {}]
  %s6 = inlined_call_operand.vmem [shape: f32[1,128], index: 6, kind: input, shape index: {}]
  %s7 = inlined_call_operand.vmem [shape: bf16[16,128], index: 7, kind: output, shape index: {}]
  %s8 = sld [smem:[#allocation0]]
  $region58: #{_mha_forward.1} parent=0
    _
  %s10 = ssub.s32 1, %s8
  %s11 = scalar_select 0, %s10, %s8
  $region1: #{_mha_forward.1} parent=0
    #allocation2 [shape = 'u8[8192]{0}', space=vmem, size = 0x2000, scoped, tag = 'input window, operand 0, single buffered']
    #allocation3 [shape = 's32[1]{0}', space=sflag, size = 0x4, scoped, tag = 'scoped memory for _mha_forward.1']
    #allocation4 [shape = 'u8[8192]{0}', space=vmem, size = 0x2000, scoped, tag = 'input window, operand 1, single buffered']
    #allocation5 [shape = 's32[1]{0}', space=sflag, size = 0x4, scoped, tag = 'scoped memory for _mha_forward.1']
    #allocation6 [shape = 'u8[8192]{0}', space=vmem, size = 0x2000, scoped, tag = 'input window, operand 3, single buffered']
    #allocation7 [shape = 'u8[8192]{0}', space=vmem, size = 0x2000, scoped, tag = 'input window, operand 4, single buffered']
    #allocation8 [shape = 's32[1]{0}', space=sflag, size = 0x4, scoped, tag = 'scoped memory for _mha_forward.1']
    #allocation9 [shape = 'u8[8192]{0}', space=vmem, size = 0x2000, scoped, tag = 'input window, operand 5, single buffered']
    %12 = vsyncpa [#allocation3], 0
    %13 = vsyncpa [#allocation5], 0
    %14 = vsyncpa [#allocation8], 0
    // Predicated region
    $region2: #{_mha_forward.1} parent=1 // pred_check
      _
    $region3: #{_mha_forward.1} parent=1 // pred_check_branch
      %16 = sbr.rel (0) target = $region5
    $region4: #{_mha_forward.1} parent=1 // pred_region
      %s18 = ssub.s32 256, 256
      %19 = vsyncadd [#allocation3], %s18
      %s20 = sshll.u32 [#allocation2], 4
      %s21 = int_to_ptr.vmem [resolvable:$true] %s20
      %26 = dma.hbm_to_vmem [thread:$0]  %s0, 256, %s21, [#allocation3], 128, 128, 8
    $region5: #{_mha_forward.1} parent=1 // pred_fallthru
      _
    // Predicated region
    $region6: #{_mha_forward.1} parent=1 // pred_check
      _
    $region7: #{_mha_forward.1} parent=1 // pred_check_branch
      %28 = sbr.rel (0) target = $region9
    $region8: #{_mha_forward.1} parent=1 // pred_region
      %s30 = ssub.s32 256, 256
      %31 = vsyncadd [#allocation5], %s30
      %s32 = sshll.u32 [#allocation4], 4
      %s33 = int_to_ptr.vmem [resolvable:$true] %s32
      %38 = dma.hbm_to_vmem [thread:$0]  %s1, 256, %s33, [#allocation5], 128, 128, 8
    $region9: #{_mha_forward.1} parent=1 // pred_fallthru
      _
    // Predicated region
    $region10: #{_mha_forward.1} parent=1 // pred_check
      _
    $region11: #{_mha_forward.1} parent=1 // pred_check_branch
      %40 = sbr.rel (0) target = $region13
    $region12: #{_mha_forward.1} parent=1 // pred_region
      _
    $region13: #{_mha_forward.1} parent=1 // pred_fallthru
      _
    // Predicated region
    $region14: #{_mha_forward.1} parent=1 // pred_check
      _
    $region15: #{_mha_forward.1} parent=1 // pred_check_branch
      %42 = sbr.rel (0) target = $region17
    $region16: #{_mha_forward.1} parent=1 // pred_region
      %s44 = ssub.s32 256, 256
      %45 = vsyncadd [#allocation5], %s44
      %s46 = sshll.u32 [#allocation6], 4
      %s47 = int_to_ptr.vmem [resolvable:$true] %s46
      %52 = dma.hbm_to_vmem [thread:$0]  %s3, 256, %s47, [#allocation5], 64, 64, 4
    $region17: #{_mha_forward.1} parent=1 // pred_fallthru
      _
    // Predicated region
    $region18: #{_mha_forward.1} parent=1 // pred_check
      _
    $region19: #{_mha_forward.1} parent=1 // pred_check_branch
      %54 = sbr.rel (0) target = $region21
    $region20: #{_mha_forward.1} parent=1 // pred_region
      %s56 = ssub.s32 256, 256
      %57 = vsyncadd [#allocation8], %s56
      %s58 = sshll.u32 [#allocation7], 4
      %s59 = int_to_ptr.vmem [resolvable:$true] %s58
      %64 = dma.hbm_to_vmem [thread:$0]  %s4, 256, %s59, [#allocation8], 64, 64, 4
    $region21: #{_mha_forward.1} parent=1 // pred_fallthru
      _
    // Predicated region
    $region22: #{_mha_forward.1} parent=1 // pred_check
      _
    $region23: #{_mha_forward.1} parent=1 // pred_check_branch
      %66 = sbr.rel (0) target = $region25
    $region24: #{_mha_forward.1} parent=1 // pred_region
      %s68 = ssub.s32 256, 256
      %69 = vsyncadd [#allocation8], %s68
      %s70 = sshll.u32 [#allocation9], 4
      %s71 = int_to_ptr.vmem [resolvable:$true] %s70
      %76 = dma.hbm_to_vmem [thread:$0]  %s5, 256, %s71, [#allocation8], 64, 64, 4
    $region25: #{_mha_forward.1} parent=1 // pred_fallthru
      _
    // Predicated region
    $region26: #{_mha_forward.1} parent=1 // pred_check
      _
    $region27: #{_mha_forward.1} parent=1 // pred_check_branch
      %78 = sbr.rel (0) target = $region29
    $region28: #{_mha_forward.1} parent=1 // pred_region
      _
    $region29: #{_mha_forward.1} parent=1 // pred_fallthru
      _
    // Predicated region
    $region30: #{_mha_forward.1} parent=1 // pred_check
      _
    $region31: #{_mha_forward.1} parent=1 // pred_check_branch
      %80 = sbr.rel (0) target = $region33
    $region32: #{_mha_forward.1} parent=1 // pred_region
      %81 = dma.done [#allocation3], 256
    $region33: #{_mha_forward.1} parent=1 // pred_fallthru
      _
    // Predicated region
    $region34: #{_mha_forward.1} parent=1 // pred_check
      _
    $region35: #{_mha_forward.1} parent=1 // pred_check_branch
      %83 = sbr.rel (0) target = $region37
    $region36: #{_mha_forward.1} parent=1 // pred_region
      %84 = dma.done [#allocation5], 256
    $region37: #{_mha_forward.1} parent=1 // pred_fallthru
      _
    // Predicated region
    $region38: #{_mha_forward.1} parent=1 // pred_check
      _
    $region39: #{_mha_forward.1} parent=1 // pred_check_branch
      %86 = sbr.rel (0) target = $region41
    $region40: #{_mha_forward.1} parent=1 // pred_region
      %87 = dma.done [#allocation5], 256
    $region41: #{_mha_forward.1} parent=1 // pred_fallthru
      _
    // Predicated region
    $region42: #{_mha_forward.1} parent=1 // pred_check
      _
    $region43: #{_mha_forward.1} parent=1 // pred_check_branch
      %89 = sbr.rel (0) target = $region45
    $region44: #{_mha_forward.1} parent=1 // pred_region
      %90 = dma.done [#allocation8], 256
    $region45: #{_mha_forward.1} parent=1 // pred_fallthru
      _
    // Predicated region
    $region46: #{_mha_forward.1} parent=1 // pred_check
      _
    $region47: #{_mha_forward.1} parent=1 // pred_check_branch
      %92 = sbr.rel (0) target = $region49
    $region48: #{_mha_forward.1} parent=1 // pred_region
      %93 = dma.done [#allocation8], 256
    $region49: #{_mha_forward.1} parent=1 // pred_fallthru
      _
    %v95 = vld [vmem:[#allocation2] sm:$0xff]
    %v96 = vld [vmem:[#allocation2 + $0x8] sm:$0xff]
    %v97 = vpack.c.bf16 %v96, %v95
    %v98 = vld [vmem:[#allocation6] sm:$0xf]
    %v99 = vld [vmem:[#allocation6 + $0x4] sm:$0xf]
    %v100 = vld [vmem:[#allocation6 + $0x8] sm:$0xf]
    %v101 = vld [vmem:[#allocation6 + $0xc] sm:$0xf]
    %v102 = vld [vmem:[#allocation4] sm:$0xff]
    %v103 = vld [vmem:[#allocation4 + $0x8] sm:$0xff]
    %v104 = vpack.c.bf16 %v103, %v102
    %v105 = vld [vmem:[#allocation7] sm:$0xf]
    %v106 = vld [vmem:[#allocation7 + $0x4] sm:$0xf]
    %v107 = vld [vmem:[#allocation7 + $0x8] sm:$0xf]
    %v108 = vld [vmem:[#allocation7 + $0xc] sm:$0xf]
    %v113 = vunpack.c.l.b16 %v105
    %v114 = vunpack.c.l.b16 %v106
    %v115 = vunpack.c.l.b16 %v107
    %v116 = vunpack.c.l.b16 %v108
    %v117 = vpack.c.b16 %v114, %v113
    %v118 = vpack.c.b16 %v116, %v115
    %vm121 = vcmask 261120
    %v123 = vsel %vm121, %v104, 0
    %125 = vmatprep.subr.bf16.mxu0 0
    %126 = vmatpush1.bf16.msra.mxu0 %v117
    %127 = vmatprep.subr.bf16.mxu0 0
    %128 = vmatpush1.bf16.msra.mxu0 %v118
    %129 = vmatprep.subr.bf16.mxu0 0
    %130 = vmatpush1.bf16.msra.mxu0 0
    %131 = vmatprep.subr.bf16.mxu0 0
    %132 = vmatpush1.bf16.msra.mxu0 0
    %133 = vmatprep.subr.bf16.mxu0 0
    %134 = vmatpush1.bf16.msra.mxu0 0
    %135 = vmatprep.subr.bf16.mxu0 0
    %136 = vmatpush1.bf16.msra.mxu0 0
    %137 = vmatprep.subr.bf16.mxu0 0
    %138 = vmatpush1.bf16.msra.mxu0 0
    %139 = vmatprep.subr.bf16.mxu0 0
    %140 = vmatpush1.bf16.msra.mxu0 0
    %141 = vmatprep.subr.bf16.mxu0 0
    %142 = vmatpush1.bf16.msra.mxu0 0
    %143 = vmatprep.subr.bf16.mxu0 0
    %144 = vmatpush1.bf16.msra.mxu0 0
    %145 = vmatprep.subr.bf16.mxu0 0
    %146 = vmatpush1.bf16.msra.mxu0 0
    %147 = vmatprep.subr.bf16.mxu0 0
    %148 = vmatpush1.bf16.msra.mxu0 0
    %149 = vmatprep.subr.bf16.mxu0 0
    %150 = vmatpush1.bf16.msra.mxu0 0
    %151 = vmatprep.subr.bf16.mxu0 0
    %152 = vmatpush1.bf16.msra.mxu0 0
    %153 = vmatprep.subr.bf16.mxu0 0
    %154 = vmatpush1.bf16.msra.mxu0 0
    %155 = vmatprep.subr.bf16.mxu0 0
    %156 = vmatpush1.bf16.msra.mxu0 0
    %157 = vmatprep.mubr.bf16.mxu0 0
    %158 = vmatmul.mubr.bf16.gmra.mrb[0].mxu0 %v123
    %v159 = vpop.f32.mrb[0].mxu0
    %v160 = vadd.f32 0.0, %v159
    %v161 = vpop.f32.mrb[0].mxu0
    %v162 = vpop.f32.mrb[0].mxu0
    %v163 = vadd.f32 0.0, %v162
    %v164 = vpop.f32.mrb[0].mxu0
    %165 = vdwg.mxu0
    %v170 = vunpack.c.l.b16 %v98
    %v171 = vunpack.c.l.b16 %v99
    %v172 = vunpack.c.l.b16 %v100
    %v173 = vunpack.c.l.b16 %v101
    %v174 = vpack.c.b16 %v171, %v170
    %v175 = vpack.c.b16 %v173, %v172
    %v179 = vsel %vm121, %v97, 0
    %181 = vmatprep.subr.bf16.mxu0 0
    %182 = vmatpush1.bf16.msra.mxu0 %v174
    %183 = vmatprep.subr.bf16.mxu0 0
    %184 = vmatpush1.bf16.msra.mxu0 %v175
    %185 = vmatprep.subr.bf16.mxu0 0
    %186 = vmatpush1.bf16.msra.mxu0 0
    %187 = vmatprep.subr.bf16.mxu0 0
    %188 = vmatpush1.bf16.msra.mxu0 0
    %189 = vmatprep.subr.bf16.mxu0 0
    %190 = vmatpush1.bf16.msra.mxu0 0
    %191 = vmatprep.subr.bf16.mxu0 0
    %192 = vmatpush1.bf16.msra.mxu0 0
    %193 = vmatprep.subr.bf16.mxu0 0
    %194 = vmatpush1.bf16.msra.mxu0 0
    %195 = vmatprep.subr.bf16.mxu0 0
    %196 = vmatpush1.bf16.msra.mxu0 0
    %197 = vmatprep.subr.bf16.mxu0 0
    %198 = vmatpush1.bf16.msra.mxu0 0
    %199 = vmatprep.subr.bf16.mxu0 0
    %200 = vmatpush1.bf16.msra.mxu0 0
    %201 = vmatprep.subr.bf16.mxu0 0
    %202 = vmatpush1.bf16.msra.mxu0 0
    %203 = vmatprep.subr.bf16.mxu0 0
    %204 = vmatpush1.bf16.msra.mxu0 0
    %205 = vmatprep.subr.bf16.mxu0 0
    %206 = vmatpush1.bf16.msra.mxu0 0
    %207 = vmatprep.subr.bf16.mxu0 0
    %208 = vmatpush1.bf16.msra.mxu0 0
    %209 = vmatprep.subr.bf16.mxu0 0
    %210 = vmatpush1.bf16.msra.mxu0 0
    %211 = vmatprep.subr.bf16.mxu0 0
    %212 = vmatpush1.bf16.msra.mxu0 0
    %213 = vmatprep.mubr.bf16.mxu0 0
    %214 = vmatmul.mubr.bf16.gmra.mrb[0].mxu0 %v179
    %v215 = vpop.f32.mrb[0].mxu0
    %v216 = vadd.f32 %v160, %v215
    %v217 = vpop.f32.mrb[0].mxu0
    %v218 = vpop.f32.mrb[0].mxu0
    %v219 = vadd.f32 %v163, %v218
    %v220 = vpop.f32.mrb[0].mxu0
    %221 = vdwg.mxu0
    %v222 = vld [vmem:[%s2] sm:$0xff]
    %v223 = vld [vmem:[%s2 + $0x8] sm:$0xff]
    %v224 = vpack.c.bf16 %v223, %v222
    %v225 = vld [vmem:[#allocation9] sm:$0xf]
    %v226 = vld [vmem:[#allocation9 + $0x4] sm:$0xf]
    %v227 = vld [vmem:[#allocation9 + $0x8] sm:$0xf]
    %v228 = vld [vmem:[#allocation9 + $0xc] sm:$0xf]
    %v233 = vunpack.c.l.b16 %v225
    %v234 = vunpack.c.l.b16 %v226
    %v235 = vunpack.c.l.b16 %v227
    %v236 = vunpack.c.l.b16 %v228
    %v237 = vpack.c.b16 %v234, %v233
    %v238 = vpack.c.b16 %v236, %v235
    %v242 = vsel %vm121, %v224, 0
    %244 = vmatprep.subr.bf16.mxu0 0
    %245 = vmatpush1.bf16.msra.mxu0 %v237
    %246 = vmatprep.subr.bf16.mxu0 0
    %247 = vmatpush1.bf16.msra.mxu0 %v238
    %248 = vmatprep.subr.bf16.mxu0 0
    %249 = vmatpush1.bf16.msra.mxu0 0
    %250 = vmatprep.subr.bf16.mxu0 0
    %251 = vmatpush1.bf16.msra.mxu0 0
    %252 = vmatprep.subr.bf16.mxu0 0
    %253 = vmatpush1.bf16.msra.mxu0 0
    %254 = vmatprep.subr.bf16.mxu0 0
    %255 = vmatpush1.bf16.msra.mxu0 0
    %256 = vmatprep.subr.bf16.mxu0 0
    %257 = vmatpush1.bf16.msra.mxu0 0
    %258 = vmatprep.subr.bf16.mxu0 0
    %259 = vmatpush1.bf16.msra.mxu0 0
    %260 = vmatprep.subr.bf16.mxu0 0
    %261 = vmatpush1.bf16.msra.mxu0 0
    %262 = vmatprep.subr.bf16.mxu0 0
    %263 = vmatpush1.bf16.msra.mxu0 0
    %264 = vmatprep.subr.bf16.mxu0 0
    %265 = vmatpush1.bf16.msra.mxu0 0
    %266 = vmatprep.subr.bf16.mxu0 0
    %267 = vmatpush1.bf16.msra.mxu0 0
    %268 = vmatprep.subr.bf16.mxu0 0
    %269 = vmatpush1.bf16.msra.mxu0 0
    %270 = vmatprep.subr.bf16.mxu0 0
    %271 = vmatpush1.bf16.msra.mxu0 0
    %272 = vmatprep.subr.bf16.mxu0 0
    %273 = vmatpush1.bf16.msra.mxu0 0
    %274 = vmatprep.subr.bf16.mxu0 0
    %275 = vmatpush1.bf16.msra.mxu0 0
    %276 = vmatprep.mubr.bf16.mxu0 0
    %277 = vmatmul.mubr.bf16.gmra.mrb[0].mxu0 %v242
    %v278 = vpop.f32.mrb[0].mxu0
    %v279 = vadd.f32 0.0, %v278
    %v280 = vpop.f32.mrb[0].mxu0
    %v281 = vpop.f32.mrb[0].mxu0
    %v282 = vadd.f32 0.0, %v281
    %v283 = vpop.f32.mrb[0].mxu0
    %284 = vdwg.mxu0
    %v285 = vadd.f32 %v216, %v279
    %v286 = vadd.f32 %v219, %v282
    %v287 = vld [vmem:[%s6] sm:$0x1]
    %v289 = vlaneseq
    %v290 = vshrl.u32 %v289, 7
    %v291 = vsub.s32 0, %v290
    %v292 = vrot.slane %v287, %v291
    %v294 = vadd.f32 %v285, %v292
    %v295 = vadd.f32 %v286, %v292
    %v296 = vpack.c.bf16 %v295, %v294
    %v298 = vunpack.c.l.b16 %v296
    %v299 = vunpack.c.h.b16 %v296
    %v300 = vpack.c.b16 %v298, %v298
    %v301 = vpack.c.b16 %v299, %v299
    %304 = vst [vmem:[%s7] sm:$0xf] %v300
    %305 = vst [vmem:[%s7 + $0x4] sm:$0xf] %v301
    // Predicated region
    $region50: #{_mha_forward.1} parent=1 // pred_check
      _
    $region51: #{_mha_forward.1} parent=1 // pred_check_branch
      %307 = sbr.rel (0) target = $region53
    $region52: #{_mha_forward.1} parent=1 // pred_region
      _
    $region53: #{_mha_forward.1} parent=1 // pred_fallthru
      _
    // Predicated region
    $region54: #{_mha_forward.1} parent=1 // pred_check
      _
    $region55: #{_mha_forward.1} parent=1 // pred_check_branch
      %309 = sbr.rel (0) target = $region57
    $region56: #{_mha_forward.1} parent=1 // pred_region
      _
    $region57: #{_mha_forward.1} parent=1 // pred_fallthru
      _
    %310 = vsyncpa [#allocation3], 1
    %311 = vsyncpa [#allocation5], 1
    %312 = vsyncpa [#allocation8], 1

</llo_original>
